<compile_context>
chip_gen: v7x
topology: tpu7x:2x2x1
jax: 0.10.0
libtpu: 0.0.40
codegen_flags: <defaults>
</compile_context>

<pallas_src>
import math

import jax
import jax.numpy as jnp
from jax.experimental import pallas as pl
from jax.experimental.pallas import tpu as pltpu

LANE = 128                       # TPU lane width
TARGET_BLOCK_ROWS = 1024         # 1024 rows x 128 lanes = 131072 points / grid step
VMEM_BUDGET_BYTES = 24 << 20     # double-buffered per-step working-set budget
INV_PI = 1.0 / math.pi


# --------------------------------------------------------------------------- #
# Kernel
# --------------------------------------------------------------------------- #
def shading_kernel(params_ref, geom_ref, alb_ref, out_ref):
    # --- scalars from SMEM (camera algebra folded host-side) ----------------
    s        = params_ref[0]    # scaling_factor
    ambient  = params_ref[1]    # exp(ambient_light_log)
    gauss_c  = params_ref[2]    # -0.5 / sigma^2   (divide folded away)
    i0       = params_ref[3]    # Gaussian1D peak intensity
    r00      = params_ref[4]    # rmat_w2c column 0
    r10      = params_ref[5]
    r20      = params_ref[6]
    t_w2c_x  = params_ref[7]    # (scaled) w2c translation, x component
    plx      = params_ref[8]    # p_l_in_w : light position in (scaled) world
    ply      = params_ref[9]
    plz      = params_ref[10]
    lx_cam   = params_ref[11]   # light x position in camera frame (t_l2c[0])

    # --- per-point math; every operand is a dense (block_rows, 128) slab ----
    px = geom_ref[0] * s
    py = geom_ref[1] * s
    pz = geom_ref[2] * s
    nx = geom_ref[3]
    ny = geom_ref[4]
    nz = geom_ref[5]

    # to_light = p_l_in_w - pts_scaled (point -> light); view_dir is unused by
    # the Lambertian BRDF and therefore not materialized.
    tlx = plx - px
    tly = ply - py
    tlz = plz - pz
    inv_l = jax.lax.rsqrt(tlx * tlx + tly * tly + tlz * tlz + 1e-12)
    inv_n = jax.lax.rsqrt(nx * nx + ny * ny + nz * nz + 1e-12)

    cosv = (nx * tlx + ny * tly + nz * tlz) * (inv_l * inv_n)
    reflectance = jnp.maximum(cosv, 0.0) * INV_PI                 # (R, 128)

    # Gaussian1D only needs the camera-frame x coordinate.
    x_cam = px * r00 + py * r10 + pz * r20 + t_w2c_x
    dx = x_cam - lx_cam
    incident = i0 * jnp.exp(gauss_c * (dx * dx))                  # (R, 128)

    shade = (incident + ambient) * reflectance                    # (R, 128)

    # softplus(albedos) * shade.  (If albedos are static across calls, softplus
    # could be precomputed once outside the kernel to save C exps/point.)
    alb = alb_ref[...]                                            # (C, R, 128)
    out_ref[...] = jnp.logaddexp(alb, 0.0) * shade[None, :, :]


# --------------------------------------------------------------------------- #
# Host-side glue
# --------------------------------------------------------------------------- #
def _pack_params(world_view_transform, light_pos_cam, scaling_factor,
                 ambient_light_log, sigma, intensity):
    """Tiny camera algebra (plain JAX glue) -> 16-float SMEM parameter vector."""
    s = jnp.asarray(scaling_factor, jnp.float32)
    w = world_view_transform.astype(jnp.float32)
    t_w2c = w[3:4, :3] * s                         # (1, 3)
    rmat = w[:3, :3]                               # (3, 3)
    t_c2w = -(rmat @ t_w2c.T)                      # (3, 1)  (view_dir origin; unused by Lambertian)
    t_l2c = light_pos_cam.reshape(3, 1).astype(jnp.float32)
    p_l_in_w = rmat @ t_l2c + t_c2w                # (3, 1)
    sigma_f = jnp.asarray(sigma, jnp.float32)
    vals = jnp.concatenate([
        jnp.stack([s,
                   jnp.exp(jnp.asarray(ambient_light_log, jnp.float32)),
                   -0.5 / (sigma_f * sigma_f),
                   jnp.asarray(intensity, jnp.float32)]),
        rmat[:, 0],                                # r00, r10, r20
        t_w2c[0, 0:1],                             # t_w2c_x
        p_l_in_w[:, 0],                            # plx, ply, plz
        t_l2c[0, 0:1],                             # lx_cam
    ]).astype(jnp.float32)
    return jnp.zeros((16,), jnp.float32).at[: vals.shape[0]].set(vals)


def _pick_block_rows(n_rows: int, channels: int) -> int:
    """Row-block size: big enough to amortize per-step overhead, small enough to
    (a) keep >=2 grid steps when possible (v7x megacore) and (b) keep the
    double-buffered working set under VMEM_BUDGET_BYTES."""
    br = min(TARGET_BLOCK_ROWS, max(8, pl.cdiv(n_rows, 2)))
    bytes_per_row_2buf = (6 + 2 * channels) * LANE * 4 * 2
    cap = max(8, (VMEM_BUDGET_BYTES // bytes_per_row_2buf) // 8 * 8)
    br = min(br, cap)
    return pl.cdiv(br, 8) * 8                      # sublane-aligned


def shading_forward_geom(geom_cf, albedos_cf, world_view_transform, light_pos_cam,
                         scaling_factor, ambient_light_log, sigma=1.0, intensity=1.0):
    """Fastest path: fused geometry stream.

    geom_cf : (6, N)  rows 0..2 = pts (world), rows 3..5 = normals.
    albedos_cf : (C, N).  Returns (C, N), float32.
    No transposes; reshapes to (ch, rows, 128) are free; inputs are only padded
    when N is not a multiple of 128 (callers should 128-align N to avoid that copy).
    """
    C, N = albedos_cf.shape
    assert geom_cf.shape == (6, N), geom_cf.shape
    params = _pack_params(world_view_transform, light_pos_cam, scaling_factor,
                          ambient_light_log, sigma, intensity)

    n_pad = pl.cdiv(N, LANE) * LANE                # lane alignment only (<=127 pts)
    n_rows = n_pad // LANE

    def prep(x):
        x = x.astype(jnp.float32)
        if n_pad != N:                             # only when N is not 128-aligned
            x = jnp.pad(x, ((0, 0), (0, n_pad - N)))
        return x.reshape(x.shape[0], n_rows, LANE)  # free row-major reshape

    geom_b = prep(geom_cf)
    alb_b = prep(albedos_cf)

    block_rows = _pick_block_rows(n_rows, C)
    n_blocks = pl.cdiv(n_rows, block_rows)         # tail handled by partial blocks

    # 2x double-buffered streams (6 geom + C albedo + C out rows) + headroom.
    vmem_bytes = (6 + 2 * C) * block_rows * LANE * 4 * 2 + (4 << 20)
    vmem_bytes = int(min(max(vmem_bytes, 16 << 20), 64 << 20))

    out_b = pl.pallas_call(
        shading_kernel,
        out_shape=jax.ShapeDtypeStruct((C, n_rows, LANE), jnp.float32),
        grid=(n_blocks,),
        in_specs=[
            pl.BlockSpec(memory_space=pltpu.SMEM),                         # scalar params
            pl.BlockSpec((6, block_rows, LANE), lambda i: (0, i, 0)),      # pts+normals
            pl.BlockSpec((C, block_rows, LANE), lambda i: (0, i, 0)),      # albedos
        ],
        out_specs=pl.BlockSpec((C, block_rows, LANE), lambda i: (0, i, 0)),
        compiler_params=pltpu.CompilerParams(
            dimension_semantics=("parallel",),     # shard row-blocks across v7x TCs
            vmem_limit_bytes=vmem_bytes),
    )(params, geom_b, alb_b)

    out = out_b.reshape(C, n_pad)
    if n_pad != N:
        out = out[:, :N]
    return out


def shading_forward_cf(pts_cf, albedos_cf, normals_cf, world_view_transform,
                       light_pos_cam, scaling_factor, ambient_light_log,
                       sigma=1.0, intensity=1.0):
    """Channels-first convenience wrapper: pts/normals (3, N), albedos (C, N).
    NOTE: the concatenate here costs one extra HBM pass over pts+normals;
    prefer building the fused (6, N) geometry stream directly."""
    geom_cf = jnp.concatenate([pts_cf, normals_cf], axis=0)
    return shading_forward_geom(geom_cf, albedos_cf, world_view_transform,
                                light_pos_cam, scaling_factor, ambient_light_log,
                                sigma, intensity)


def shading_forward(pts, albedos, normals, world_view_transform, light_pos_cam,
                    scaling_factor, ambient_light_log, sigma=1.0, intensity=1.0):
    """PyTorch-layout wrapper: pts/normals (N,3), albedos (N,C) -> (N,C).
    Each .T costs a full HBM pass; prefer the channels-first paths."""
    out_cf = shading_forward_cf(pts.T, albedos.T, normals.T, world_view_transform,
                                light_pos_cam, scaling_factor, ambient_light_log,
                                sigma, intensity)
    return out_cf.T


def reference_forward(pts, albedos, normals, world_view_transform, light_pos_cam,
                      scaling_factor, ambient_light_log, sigma=1.0, intensity=1.0):
    """Pure-JAX mirror of the torch forward (same Lambertian/Gaussian1D choices)."""
    s = jnp.asarray(scaling_factor, jnp.float32)
    w = world_view_transform.astype(jnp.float32)
    pts_scaled = pts * s
    t_w2c = w[3:4, :3] * s
    rmat = w[:3, :3]
    t_c2w = -(rmat @ t_w2c.T)
    t_l2c = light_pos_cam.reshape(3, 1).astype(jnp.float32)
    p_l_in_w = rmat @ t_l2c + t_c2w
    light_dir = -p_l_in_w.T + pts_scaled                         # (N, 3)
    _view_dir = t_c2w.T - pts_scaled                             # unused (Lambertian)
    to_light = -light_dir
    inv_l = jax.lax.rsqrt(jnp.sum(to_light * to_light, -1, keepdims=True) + 1e-12)
    inv_n = jax.lax.rsqrt(jnp.sum(normals * normals, -1, keepdims=True) + 1e-12)
    cosv = jnp.sum(normals * to_light, -1, keepdims=True) * inv_l * inv_n
    reflectance = jnp.maximum(cosv, 0.0) / math.pi               # (N, 1)
    pts_in_cam = pts_scaled @ rmat + t_w2c                       # (N, 3)
    dx = (pts_in_cam[:, 0:1] - t_l2c[0, 0]) / sigma
    incident = intensity * jnp.exp(-0.5 * dx * dx)               # (N, 1)
    ambient = jnp.exp(jnp.asarray(ambient_light_log, jnp.float32))
    return jnp.logaddexp(albedos, 0.0) * (incident + ambient) * reflectance


# --------------------------------------------------------------------------- #
# Demo / self-check
# --------------------------------------------------------------------------- #
if __name__ == "__main__":
    key = jax.random.PRNGKey(0)
    k1, k2, k3 = jax.random.split(key, 3)

    # 4096 points, RGB albedos.  Geometry is built directly as the fused
    # channels-first (6, N) stream: rows 0..2 = pts, rows 3..5 = unit normals.
    N, C = 4096, 3
    pts_cf = jax.random.normal(k1, (3, N), jnp.float32) * 2.0
    nrm_raw = jax.random.normal(k2, (3, N), jnp.float32)
    normals_cf = nrm_raw / jnp.linalg.norm(nrm_raw, axis=0, keepdims=True)
    albedos_cf = jax.random.normal(k3, (C, N), jnp.float32)
    geom_cf = jnp.concatenate([pts_cf, normals_cf], axis=0)      # (6, N)

    # deterministic camera: rotation about z + translation row (GS-style 4x4)
    th = 0.3
    rot = jnp.array([[jnp.cos(th), -jnp.sin(th), 0.0],
                     [jnp.sin(th),  jnp.cos(th), 0.0],
                     [0.0,          0.0,         1.0]], jnp.float32)
    world_view_transform = jnp.eye(4, dtype=jnp.float32)
    world_view_transform = world_view_transform.at[:3, :3].set(rot)
    world_view_transform = world_view_transform.at[3, :3].set(
        jnp.array([0.2, -0.1, 1.5], jnp.float32))

    light_pos_cam = jnp.array([0.5, -0.2, 1.0], jnp.float32)     # light.t_l2c()

    # nn.Parameter defaults from __init__ (albedo_log unused in forward)
    scaling_factor = 0.1
    ambient_light_log = 0.1

    fwd = jax.jit(shading_forward_geom)

    # --- main check: 128-aligned N, even 2-step grid (both v7x cores busy) ---
    out = fwd(geom_cf, albedos_cf, world_view_transform, light_pos_cam,
              scaling_factor, ambient_light_log)
    out = jax.block_until_ready(out)
    ref = reference_forward(pts_cf.T, albedos_cf.T, normals_cf.T,
                            world_view_transform, light_pos_cam,
                            scaling_factor, ambient_light_log)
    assert out.shape == (C, N), out.shape
    assert bool(jnp.all(jnp.isfinite(out)))
    assert jnp.allclose(out, ref.T, atol=1e-5, rtol=1e-5), \
        float(jnp.max(jnp.abs(out - ref.T)))

    # --- tail check: N not a multiple of 128 (lane pad) nor of the block
    #     (Pallas partial-block clipping on the row axis) ----------------------
    N2 = 3333
    out2 = jax.jit(shading_forward_geom)(
        geom_cf[:, :N2], albedos_cf[:, :N2], world_view_transform, light_pos_cam,
        scaling_factor, ambient_light_log)
    out2 = jax.block_until_ready(out2)
    ref2 = reference_forward(pts_cf[:, :N2].T, albedos_cf[:, :N2].T,
                             normals_cf[:, :N2].T, world_view_transform,
                             light_pos_cam, scaling_factor, ambient_light_log)
    assert out2.shape == (C, N2), out2.shape
    assert bool(jnp.all(jnp.isfinite(out2)))
    assert jnp.allclose(out2, ref2.T, atol=1e-5, rtol=1e-5), \
        float(jnp.max(jnp.abs(out2 - ref2.T)))

    print("KERNEL_OK")
</pallas_src>

<mosaic_0001>
module attributes {stable_mosaic.version = 11 : i64} {
  func.func @shading_kernel(%arg0: i32, %arg1: memref<16xf32, #tpu.memory_space<smem>>, %arg2: memref<6x16x128xf32, #tpu.memory_space<vmem>>, %arg3: memref<3x16x128xf32, #tpu.memory_space<vmem>>, %arg4: memref<3x16x128xf32, #tpu.memory_space<vmem>>) attributes {dimension_semantics = [#tpu.dimension_semantics<parallel>], iteration_bounds = array<i64: 2>, scalar_prefetch = 0 : i64, scratch_operands = 0 : i64, tpu.core_type = #tpu.core_type<tc>, window_params = [{transform_indices = @transform_0, window_bounds = array<i64: 16>}, {transform_indices = @transform_1, window_bounds = array<i64: 6, 16, 128>}, {transform_indices = @transform_2, window_bounds = array<i64: 3, 16, 128>}, {transform_indices = @transform_3, window_bounds = array<i64: 3, 16, 128>}]} {
    %c0 = arith.constant 0 : index
    %0 = memref.load %arg1[%c0] : memref<16xf32, #tpu.memory_space<smem>>
    %c1 = arith.constant 1 : index
    %1 = memref.load %arg1[%c1] : memref<16xf32, #tpu.memory_space<smem>>
    %c2 = arith.constant 2 : index
    %2 = memref.load %arg1[%c2] : memref<16xf32, #tpu.memory_space<smem>>
    %c3 = arith.constant 3 : index
    %3 = memref.load %arg1[%c3] : memref<16xf32, #tpu.memory_space<smem>>
    %c4 = arith.constant 4 : index
    %4 = memref.load %arg1[%c4] : memref<16xf32, #tpu.memory_space<smem>>
    %c5 = arith.constant 5 : index
    %5 = memref.load %arg1[%c5] : memref<16xf32, #tpu.memory_space<smem>>
    %c6 = arith.constant 6 : index
    %6 = memref.load %arg1[%c6] : memref<16xf32, #tpu.memory_space<smem>>
    %c7 = arith.constant 7 : index
    %7 = memref.load %arg1[%c7] : memref<16xf32, #tpu.memory_space<smem>>
    %c8 = arith.constant 8 : index
    %8 = memref.load %arg1[%c8] : memref<16xf32, #tpu.memory_space<smem>>
    %c9 = arith.constant 9 : index
    %9 = memref.load %arg1[%c9] : memref<16xf32, #tpu.memory_space<smem>>
    %c10 = arith.constant 10 : index
    %10 = memref.load %arg1[%c10] : memref<16xf32, #tpu.memory_space<smem>>
    %c11 = arith.constant 11 : index
    %11 = memref.load %arg1[%c11] : memref<16xf32, #tpu.memory_space<smem>>
    %c0_0 = arith.constant 0 : index
    %c0_1 = arith.constant 0 : index
    %c0_2 = arith.constant 0 : index
    %12 = vector.load %arg2[%c0_0, %c0_1, %c0_2] : memref<6x16x128xf32, #tpu.memory_space<vmem>>, vector<1x16x128xf32>
    %13 = vector.shape_cast %12 : vector<1x16x128xf32> to vector<16x128xf32>
    %14 = vector.broadcast %0 : f32 to vector<16x128xf32>
    %15 = arith.mulf %13, %14 : vector<16x128xf32>
    %c1_3 = arith.constant 1 : index
    %c0_4 = arith.constant 0 : index
    %c0_5 = arith.constant 0 : index
    %16 = vector.load %arg2[%c1_3, %c0_4, %c0_5] : memref<6x16x128xf32, #tpu.memory_space<vmem>>, vector<1x16x128xf32>
    %17 = vector.shape_cast %16 : vector<1x16x128xf32> to vector<16x128xf32>
    %18 = vector.broadcast %0 : f32 to vector<16x128xf32>
    %19 = arith.mulf %17, %18 : vector<16x128xf32>
    %c2_6 = arith.constant 2 : index
    %c0_7 = arith.constant 0 : index
    %c0_8 = arith.constant 0 : index
    %20 = vector.load %arg2[%c2_6, %c0_7, %c0_8] : memref<6x16x128xf32, #tpu.memory_space<vmem>>, vector<1x16x128xf32>
    %21 = vector.shape_cast %20 : vector<1x16x128xf32> to vector<16x128xf32>
    %22 = vector.broadcast %0 : f32 to vector<16x128xf32>
    %23 = arith.mulf %21, %22 : vector<16x128xf32>
    %c3_9 = arith.constant 3 : index
    %c0_10 = arith.constant 0 : index
    %c0_11 = arith.constant 0 : index
    %24 = vector.load %arg2[%c3_9, %c0_10, %c0_11] : memref<6x16x128xf32, #tpu.memory_space<vmem>>, vector<1x16x128xf32>
    %25 = vector.shape_cast %24 : vector<1x16x128xf32> to vector<16x128xf32>
    %c4_12 = arith.constant 4 : index
    %c0_13 = arith.constant 0 : index
    %c0_14 = arith.constant 0 : index
    %26 = vector.load %arg2[%c4_12, %c0_13, %c0_14] : memref<6x16x128xf32, #tpu.memory_space<vmem>>, vector<1x16x128xf32>
    %27 = vector.shape_cast %26 : vector<1x16x128xf32> to vector<16x128xf32>
    %c5_15 = arith.constant 5 : index
    %c0_16 = arith.constant 0 : index
    %c0_17 = arith.constant 0 : index
    %28 = vector.load %arg2[%c5_15, %c0_16, %c0_17] : memref<6x16x128xf32, #tpu.memory_space<vmem>>, vector<1x16x128xf32>
    %29 = vector.shape_cast %28 : vector<1x16x128xf32> to vector<16x128xf32>
    %30 = vector.broadcast %8 : f32 to vector<16x128xf32>
    %31 = arith.subf %30, %15 : vector<16x128xf32>
    %32 = vector.broadcast %9 : f32 to vector<16x128xf32>
    %33 = arith.subf %32, %19 : vector<16x128xf32>
    %34 = vector.broadcast %10 : f32 to vector<16x128xf32>
    %35 = arith.subf %34, %23 : vector<16x128xf32>
    %36 = arith.mulf %31, %31 : vector<16x128xf32>
    %37 = arith.mulf %33, %33 : vector<16x128xf32>
    %38 = arith.addf %36, %37 : vector<16x128xf32>
    %39 = arith.mulf %35, %35 : vector<16x128xf32>
    %40 = arith.addf %38, %39 : vector<16x128xf32>
    %cst = arith.constant 9.99999996E-13 : f32
    %41 = vector.broadcast %cst : f32 to vector<16x128xf32>
    %42 = arith.addf %40, %41 : vector<16x128xf32>
    %43 = math.rsqrt %42 : vector<16x128xf32>
    %44 = arith.mulf %25, %25 : vector<16x128xf32>
    %45 = arith.mulf %27, %27 : vector<16x128xf32>
    %46 = arith.addf %44, %45 : vector<16x128xf32>
    %47 = arith.mulf %29, %29 : vector<16x128xf32>
    %48 = arith.addf %46, %47 : vector<16x128xf32>
    %cst_18 = arith.constant 9.99999996E-13 : f32
    %49 = vector.broadcast %cst_18 : f32 to vector<16x128xf32>
    %50 = arith.addf %48, %49 : vector<16x128xf32>
    %51 = math.rsqrt %50 : vector<16x128xf32>
    %52 = arith.mulf %25, %31 : vector<16x128xf32>
    %53 = arith.mulf %27, %33 : vector<16x128xf32>
    %54 = arith.addf %52, %53 : vector<16x128xf32>
    %55 = arith.mulf %29, %35 : vector<16x128xf32>
    %56 = arith.addf %54, %55 : vector<16x128xf32>
    %57 = arith.mulf %43, %51 : vector<16x128xf32>
    %58 = arith.mulf %56, %57 : vector<16x128xf32>
    %cst_19 = arith.constant 0.000000e+00 : f32
    %59 = vector.broadcast %cst_19 : f32 to vector<16x128xf32>
    %60 = arith.maximumf %58, %59 : vector<16x128xf32>
    %cst_20 = arith.constant 0.318309873 : f32
    %61 = vector.broadcast %cst_20 : f32 to vector<16x128xf32>
    %62 = arith.mulf %60, %61 : vector<16x128xf32>
    %63 = vector.broadcast %4 : f32 to vector<16x128xf32>
    %64 = arith.mulf %15, %63 : vector<16x128xf32>
    %65 = vector.broadcast %5 : f32 to vector<16x128xf32>
    %66 = arith.mulf %19, %65 : vector<16x128xf32>
    %67 = arith.addf %64, %66 : vector<16x128xf32>
    %68 = vector.broadcast %6 : f32 to vector<16x128xf32>
    %69 = arith.mulf %23, %68 : vector<16x128xf32>
    %70 = arith.addf %67, %69 : vector<16x128xf32>
    %71 = vector.broadcast %7 : f32 to vector<16x128xf32>
    %72 = arith.addf %70, %71 : vector<16x128xf32>
    %73 = vector.broadcast %11 : f32 to vector<16x128xf32>
    %74 = arith.subf %72, %73 : vector<16x128xf32>
    %75 = arith.mulf %74, %74 : vector<16x128xf32>
    %76 = vector.broadcast %2 : f32 to vector<16x128xf32>
    %77 = arith.mulf %76, %75 : vector<16x128xf32>
    %78 = math.exp %77 : vector<16x128xf32>
    %79 = vector.broadcast %3 : f32 to vector<16x128xf32>
    %80 = arith.mulf %79, %78 : vector<16x128xf32>
    %81 = vector.broadcast %1 : f32 to vector<16x128xf32>
    %82 = arith.addf %80, %81 : vector<16x128xf32>
    %83 = arith.mulf %82, %62 : vector<16x128xf32>
    %c0_21 = arith.constant 0 : index
    %c0_22 = arith.constant 0 : index
    %c0_23 = arith.constant 0 : index
    %84 = vector.load %arg3[%c0_21, %c0_22, %c0_23] : memref<3x16x128xf32, #tpu.memory_space<vmem>>, vector<3x16x128xf32>
    %cst_24 = arith.constant 0.000000e+00 : f32
    %85 = vector.broadcast %cst_24 : f32 to vector<3x16x128xf32>
    %86 = arith.maximumf %84, %85 : vector<3x16x128xf32>
    %87 = vector.broadcast %cst_24 : f32 to vector<3x16x128xf32>
    %88 = arith.subf %84, %87 : vector<3x16x128xf32>
    %89 = arith.cmpf one, %88, %88 : vector<3x16x128xf32>
    %90 = vector.broadcast %cst_24 : f32 to vector<3x16x128xf32>
    %91 = arith.addf %84, %90 : vector<3x16x128xf32>
    %92 = math.absf %88 : vector<3x16x128xf32>
    %cst_25 = arith.constant 0.000000e+00 : f32
    %93 = vector.broadcast %cst_25 : f32 to vector<3x16x128xf32>
    %94 = arith.subf %93, %92 : vector<3x16x128xf32>
    %95 = math.exp %94 : vector<3x16x128xf32>
    %96 = math.log1p %95 : vector<3x16x128xf32>
    %97 = arith.addf %86, %96 : vector<3x16x128xf32>
    %98 = arith.select %89, %91, %97 : vector<3x16x128xi1>, vector<3x16x128xf32>
    %99 = vector.shape_cast %83 : vector<16x128xf32> to vector<1x16x128xf32>
    %100 = vector.broadcast %99 : vector<1x16x128xf32> to vector<3x16x128xf32>
    %101 = arith.mulf %98, %100 : vector<3x16x128xf32>
    %c0_26 = arith.constant 0 : index
    %c0_27 = arith.constant 0 : index
    %c0_28 = arith.constant 0 : index
    %102 = vector.load %arg4[%c0_26, %c0_27, %c0_28] : memref<3x16x128xf32, #tpu.memory_space<vmem>>, vector<3x16x128xf32>
    tpu.vector_store %arg4[%c0_26, %c0_27, %c0_28], %101 {strides = array<i32>} : memref<3x16x128xf32, #tpu.memory_space<vmem>>, vector<3x16x128xf32>,
    return
  }
  func.func @transform_0(%arg0: i32) -> i32 {
    %c0_i32 = arith.constant 0 : i32
    %c0_i32_0 = arith.constant 0 : i32
    return %c0_i32 : i32
  }
  func.func @transform_1(%arg0: i32) -> (i32, i32, i32) {
    %c0_i32 = arith.constant 0 : i32
    %c0_i32_0 = arith.constant 0 : i32
    %c0_i32_1 = arith.constant 0 : i32
    return %c0_i32, %arg0, %c0_i32_0 : i32, i32, i32
  }
  func.func @transform_2(%arg0: i32) -> (i32, i32, i32) {
    %c0_i32 = arith.constant 0 : i32
    %c0_i32_0 = arith.constant 0 : i32
    %c0_i32_1 = arith.constant 0 : i32
    return %c0_i32, %arg0, %c0_i32_0 : i32, i32, i32
  }
  func.func @transform_3(%arg0: i32) -> (i32, i32, i32) {
    %c0_i32 = arith.constant 0 : i32
    %c0_i32_0 = arith.constant 0 : i32
    %c0_i32_1 = arith.constant 0 : i32
    return %c0_i32, %arg0, %c0_i32_0 : i32, i32, i32
  }
}

</mosaic_0001>

<llo_original>
// kernel: shading_forward_geom.1
$region0: #{shading_forward_geom.1}
  #allocation0 [shape = 'u32[]', space=smem, size = 0x4, offset = 0x4, fixed_abs, tag = 'smem constant byte address 0x4 - core index']
  #allocation1 [shape = 'u32[144,128]{1,0:T(1,128)}', space=vmem, size = 0x12000, scoped, tag = 'internal scratch']
  %s0 = inlined_call_operand.vmem [shape: f32[16], index: 0, kind: input, shape index: {}]
  %s1 = inlined_call_operand.vmem [shape: f32[6,32,128], index: 1, kind: input, shape index: {}]
  %s2 = inlined_call_operand.vmem [shape: f32[3,32,128], index: 2, kind: input, shape index: {}]
  %s3 = inlined_call_operand.vmem [shape: f32[3,32,128], index: 3, kind: output, shape index: {}]
  %s4 = sld [smem:[#allocation0]]
  $region159: #{shading_forward_geom.1} parent=0
    _
  %s6 = ssub.s32 1, %s4
  %s7 = scalar_select 0, %s6, %s4
  $region1: #{shading_forward_geom.1} parent=0
    #allocation2 [shape = 'u8[512]{0}', space=smem, size = 0x200, scoped, tag = 'input window, operand 0, single buffered']
    #allocation3 [shape = 's32[2]{0}', space=sflag, size = 0x8, scoped, tag = 'scoped memory for shading_forward_geom.1']
    #allocation4 [shape = 'u8[98304]{0}', space=vmem, size = 0x18000, scoped, tag = 'input window, operand 1']
    #allocation5 [shape = 'u8[49152]{0}', space=vmem, size = 0xc000, scoped, tag = 'input window, operand 2']
    #allocation6 [shape = 'u8[49152]{0}', space=vmem, size = 0xc000, scoped, tag = 'output window, operand 0']
    %8 = vsyncpa [#allocation3], 0
    loop: start=0, step=1, limit=4
    $region2: #{shading_forward_geom.1} parent=1 // loop_pre_header
      _
    $region3: #{shading_forward_geom.1} parent=1 // loop_header
      %s10 = sphi 0, %s14
      %p11 = scmp.ge.s32.totalorder %s10, 4
      %s18 = sphi 0, %s18
      %s20 = sphi 0, %s18
      %s21 = sphi 0, %s20
      %s35 = sphi 0, %s21
      %s41 = sphi 0, %s43
      %s44 = sphi 0, %s41
      %s45 = sphi 0, %s44
      %s61 = sphi 0, %s45
      %s67 = sphi 0, %s69
      %s70 = sphi 0, %s67
      %s71 = sphi 0, %s70
      %s87 = sphi 0, %s71
      %s93 = sphi 0, %s95
      %s96 = sphi 0, %s93
      %s97 = sphi 0, %s96
      %s113 = sphi 0, %s97
    $region4: #{shading_forward_geom.1} parent=1 // loop_header_branch
      %13 = sbr.rel (%p11) target = $region8
    $region5: #{shading_forward_geom.1} parent=1 // loop_body
      %s15 = ssub.s32 %s10, 1
      %s16 = ssub.s32 %s10, 2
      %s17 = sadd.s32 %s10, 1
      %s19 = sadd.s32 %s18, 1
      %p22 = scmp.eq.s32.totalorder %s10, 1
      %p23 = scmp.ne.s32.totalorder %s18, %s20
      %p24 = scmp.eq.s32.totalorder %s10, 0
      %p25 = por %p23, %p24
      %p26 = scmp.ne.s32.totalorder %s18, %s20
      %p27 = scmp.eq.s32.totalorder %s15, 1
      %p28 = por %p26, %p27
      %p29 = scmp.ne.s32.totalorder %s20, %s21
      %p30 = scmp.eq.s32.totalorder %s15, 0
      %p31 = por %p29, %p30
      %p32 = scmp.ne.s32.totalorder %s20, %s21
      %p33 = scmp.eq.s32.totalorder %s16, 1
      %p34 = por %p32, %p33
      %p36 = scmp.ne.s32.totalorder %s21, %s35
      %p37 = scmp.eq.s32.totalorder %s16, 0
      %p38 = por %p36, %p37
      %s39 = ssub.s32 %s10, %s17
      %p40 = scmp.eq.s32.totalorder %s39, 0
      %s42 = sadd.s32 %s41, 1
      %s43 = scalar_select %p40, %s41, %s42
      %p46 = pneg %p40
      %p47 = scmp.eq.s32.totalorder %s10, 1
      %p48 = por %p46, %p47
      %p49 = scmp.ne.s32.totalorder %s41, %s44
      %p50 = scmp.eq.s32.totalorder %s10, 0
      %p51 = por %p49, %p50
      %p52 = scmp.ne.s32.totalorder %s41, %s44
      %p53 = scmp.eq.s32.totalorder %s15, 1
      %p54 = por %p52, %p53
      %p55 = scmp.ne.s32.totalorder %s44, %s45
      %p56 = scmp.eq.s32.totalorder %s15, 0
      %p57 = por %p55, %p56
      %p58 = scmp.ne.s32.totalorder %s44, %s45
      %p59 = scmp.eq.s32.totalorder %s16, 1
      %p60 = por %p58, %p59
      %p62 = scmp.ne.s32.totalorder %s45, %s61
      %p63 = scmp.eq.s32.totalorder %s16, 0
      %p64 = por %p62, %p63
      %s65 = ssub.s32 %s10, %s17
      %p66 = scmp.eq.s32.totalorder %s65, 0
      %s68 = sadd.s32 %s67, 1
      %s69 = scalar_select %p66, %s67, %s68
      %p72 = pneg %p66
      %p73 = scmp.eq.s32.totalorder %s10, 1
      %p74 = por %p72, %p73
      %p75 = scmp.ne.s32.totalorder %s67, %s70
      %p76 = scmp.eq.s32.totalorder %s10, 0
      %p77 = por %p75, %p76
      %p78 = scmp.ne.s32.totalorder %s67, %s70
      %p79 = scmp.eq.s32.totalorder %s15, 1
      %p80 = por %p78, %p79
      %p81 = scmp.ne.s32.totalorder %s70, %s71
      %p82 = scmp.eq.s32.totalorder %s15, 0
      %p83 = por %p81, %p82
      %p84 = scmp.ne.s32.totalorder %s70, %s71
      %p85 = scmp.eq.s32.totalorder %s16, 1
      %p86 = por %p84, %p85
      %p88 = scmp.ne.s32.totalorder %s71, %s87
      %p89 = scmp.eq.s32.totalorder %s16, 0
      %p90 = por %p88, %p89
      %s91 = ssub.s32 %s10, %s17
      %p92 = scmp.eq.s32.totalorder %s91, 0
      %s94 = sadd.s32 %s93, 1
      %s95 = scalar_select %p92, %s93, %s94
      %p98 = pneg %p92
      %p99 = scmp.eq.s32.totalorder %s10, 1
      %p100 = por %p98, %p99
      %p101 = scmp.ne.s32.totalorder %s93, %s96
      %p102 = scmp.eq.s32.totalorder %s10, 0
      %p103 = por %p101, %p102
      %p104 = scmp.ne.s32.totalorder %s93, %s96
      %p105 = scmp.eq.s32.totalorder %s15, 1
      %p106 = por %p104, %p105
      %p107 = scmp.ne.s32.totalorder %s96, %s97
      %p108 = scmp.eq.s32.totalorder %s15, 0
      %p109 = por %p107, %p108
      %p110 = scmp.ne.s32.totalorder %s96, %s97
      %p111 = scmp.eq.s32.totalorder %s16, 1
      %p112 = por %p110, %p111
      %p114 = scmp.ne.s32.totalorder %s97, %s113
      %p115 = scmp.eq.s32.totalorder %s16, 0
      %p116 = por %p114, %p115
      %p117 = scmp.le.s32.totalorder 1, %s10
      %p118 = scmp.lt.s32.totalorder %s10, 3
      %p119 = pnand %p117, %p118
      %p120 = pneg %p119
      // Predicated region
      $region9: #{shading_forward_geom.1} parent=5 // pred_check
        _
      $region10: #{shading_forward_geom.1} parent=5 // pred_check_branch
        %122 = sbr.rel (%p119) target = $region12
      $region11: #{shading_forward_geom.1} parent=5 // pred_region
        %s123 = ssub.s32 %s10, 1
        // Predicated region
        $region13: #{shading_forward_geom.1} parent=11 // pred_check
          %p124 = pneg %p31
        $region14: #{shading_forward_geom.1} parent=11 // pred_check_branch
          %126 = sbr.rel (%p124) target = $region16
        $region15: #{shading_forward_geom.1} parent=11 // pred_region
          %s128 = ssub.s32 16, 16
          %129 = vsyncadd [#allocation3], %s128
          %s131 = sshll.u32 %s0, 4
          %s132 = int_to_ptr.vmem [resolvable:$true] %s131
          %134 = dma.vmem_to_smem %s132, 16, [#allocation2], [#allocation3]
        $region16: #{shading_forward_geom.1} parent=11 // pred_fallthru
          _
      $region12: #{shading_forward_geom.1} parent=5 // pred_fallthru
        _
      %p135 = scmp.lt.s32.totalorder %s10, 2
      // Predicated region
      $region17: #{shading_forward_geom.1} parent=5 // pred_check
        %p136 = pneg %p135
      $region18: #{shading_forward_geom.1} parent=5 // pred_check_branch
        %138 = sbr.rel (%p136) target = $region20
      $region19: #{shading_forward_geom.1} parent=5 // pred_region
        // Predicated region
        $region21: #{shading_forward_geom.1} parent=19 // pred_check
          %p139 = pneg %p51
        $region22: #{shading_forward_geom.1} parent=19 // pred_check_branch
          %141 = sbr.rel (%p139) target = $region24
        $region23: #{shading_forward_geom.1} parent=19 // pred_region
          %s142 = sand.u32 %s41, 1
          %s143 = sand.u32 %s41, 1
          %s144 = smul.addr %s143, 96
          %s145 = scalar_lea.vmem [#allocation4], %s144
          %s146 = smul.u32 2, %s10
          %s147 = smul.addr %s146, 8
          %s148 = scalar_lea.vmem %s1, %s147
          // Predicated region
          $region25: #{shading_forward_geom.1} parent=23 // pred_check
            _
          $region26: #{shading_forward_geom.1} parent=23 // pred_check_branch
            %150 = sbr.rel (0) target = $region28
          $region27: #{shading_forward_geom.1} parent=23 // pred_region
            // Predicated region
            $region29: #{shading_forward_geom.1} parent=27 // pred_check
              _
            $region30: #{shading_forward_geom.1} parent=27 // pred_check_branch
              %152 = sbr.rel (0) target = $region32
            $region31: #{shading_forward_geom.1} parent=27 // pred_region
              // Predicated region
              $region44: #{shading_forward_geom.1} parent=31 // pred_check
                _
              $region45: #{shading_forward_geom.1} parent=31 // pred_check_branch
                %189 = sbr.rel (0) target = $region47
              $region46: #{shading_forward_geom.1} parent=31 // pred_region
                loop: start=0, step=1, limit=1
                $region48: #{shading_forward_geom.1} parent=46 // loop_pre_header
                  _
                $region49: #{shading_forward_geom.1} parent=46 // loop_header
                  %s191 = sphi 0, %s195
                  %p192 = scmp.ge.s32.totalorder %s191, 1
                  %s196 = sphi %s148, %s148
                  %s197 = sphi %s145, %s145
                $region50: #{shading_forward_geom.1} parent=46 // loop_header_branch
                  %194 = sbr.rel (%p192) target = $region54
                $region51: #{shading_forward_geom.1} parent=46 // loop_body
                  %v198 = vld [vmem:[%s196] sm:$0xff]
                  %199 = vst [vmem:[%s197] sm:$0xff] %v198
                  %v200 = vld [vmem:[%s196 + $0x8] sm:$0xff]
                  %201 = vst [vmem:[%s197 + $0x8] sm:$0xff] %v200
                  %v202 = vld [vmem:[%s196 + $0x20] sm:$0xff]
                  %203 = vst [vmem:[%s197 + $0x10] sm:$0xff] %v202
                  %v204 = vld [vmem:[%s196 + $0x28] sm:$0xff]
                  %205 = vst [vmem:[%s197 + $0x18] sm:$0xff] %v204
                  %v206 = vld [vmem:[%s196 + $0x40] sm:$0xff]
                  %207 = vst [vmem:[%s197 + $0x20] sm:$0xff] %v206
                  %v208 = vld [vmem:[%s196 + $0x48] sm:$0xff]
                  %209 = vst [vmem:[%s197 + $0x28] sm:$0xff] %v208
                  %v210 = vld [vmem:[%s196 + $0x60] sm:$0xff]
                  %211 = vst [vmem:[%s197 + $0x30] sm:$0xff] %v210
                  %v212 = vld [vmem:[%s196 + $0x68] sm:$0xff]
                  %213 = vst [vmem:[%s197 + $0x38] sm:$0xff] %v212
                  %v214 = vld [vmem:[%s196 + $0x80] sm:$0xff]
                  %215 = vst [vmem:[%s197 + $0x40] sm:$0xff] %v214
                  %v216 = vld [vmem:[%s196 + $0x88] sm:$0xff]
                  %217 = vst [vmem:[%s197 + $0x48] sm:$0xff] %v216
                  %v218 = vld [vmem:[%s196 + $0xa0] sm:$0xff]
                  %219 = vst [vmem:[%s197 + $0x50] sm:$0xff] %v218
                  %v220 = vld [vmem:[%s196 + $0xa8] sm:$0xff]
                  %221 = vst [vmem:[%s197 + $0x58] sm:$0xff] %v220
                $region52: #{shading_forward_geom.1} parent=46 // loop_footer
                  %s195 = sadd.s32 1, %s191
                $region53: #{shading_forward_geom.1} parent=46 // loop_footer_branch
                  %190 = sbr.rel target = $region49
                $region54: #{shading_forward_geom.1} parent=46 // loop_exit
                  _
              $region47: #{shading_forward_geom.1} parent=31 // pred_fallthru
                _
              // Predicated region
              $region55: #{shading_forward_geom.1} parent=31 // pred_check
                _
              $region56: #{shading_forward_geom.1} parent=31 // pred_check_branch
                %223 = sbr.rel target = $region58
              $region57: #{shading_forward_geom.1} parent=31 // pred_region
                _
              $region58: #{shading_forward_geom.1} parent=31 // pred_fallthru
                _
            $region32: #{shading_forward_geom.1} parent=27 // pred_fallthru
              _
            // Predicated region
            $region33: #{shading_forward_geom.1} parent=27 // pred_check
              _
            $region34: #{shading_forward_geom.1} parent=27 // pred_check_branch
              %154 = sbr.rel target = $region36
            $region35: #{shading_forward_geom.1} parent=27 // pred_region
              loop: start=0, step=1, limit=1
              $region37: #{shading_forward_geom.1} parent=35 // loop_pre_header
                _
              $region38: #{shading_forward_geom.1} parent=35 // loop_header
                %s157 = sphi 0, %s161
                %p158 = scmp.ge.s32.totalorder %s157, 1
                %s162 = sphi %s148, %s148
                %s163 = sphi %s145, %s145
              $region39: #{shading_forward_geom.1} parent=35 // loop_header_branch
                %160 = sbr.rel (%p158) target = $region43
              $region40: #{shading_forward_geom.1} parent=35 // loop_body
                %v164 = vld [vmem:[%s162] sm:$0xff]
                %165 = vst [vmem:[%s163] sm:$0xff] %v164
                %v166 = vld [vmem:[%s162 + $0x8] sm:$0xff]
                %167 = vst [vmem:[%s163 + $0x8] sm:$0xff] %v166
                %v168 = vld [vmem:[%s162 + $0x20] sm:$0xff]
                %169 = vst [vmem:[%s163 + $0x10] sm:$0xff] %v168
                %v170 = vld [vmem:[%s162 + $0x28] sm:$0xff]
                %171 = vst [vmem:[%s163 + $0x18] sm:$0xff] %v170
                %v172 = vld [vmem:[%s162 + $0x40] sm:$0xff]
                %173 = vst [vmem:[%s163 + $0x20] sm:$0xff] %v172
                %v174 = vld [vmem:[%s162 + $0x48] sm:$0xff]
                %175 = vst [vmem:[%s163 + $0x28] sm:$0xff] %v174
                %v176 = vld [vmem:[%s162 + $0x60] sm:$0xff]
                %177 = vst [vmem:[%s163 + $0x30] sm:$0xff] %v176
                %v178 = vld [vmem:[%s162 + $0x68] sm:$0xff]
                %179 = vst [vmem:[%s163 + $0x38] sm:$0xff] %v178
                %v180 = vld [vmem:[%s162 + $0x80] sm:$0xff]
                %181 = vst [vmem:[%s163 + $0x40] sm:$0xff] %v180
                %v182 = vld [vmem:[%s162 + $0x88] sm:$0xff]
                %183 = vst [vmem:[%s163 + $0x48] sm:$0xff] %v182
                %v184 = vld [vmem:[%s162 + $0xa0] sm:$0xff]
                %185 = vst [vmem:[%s163 + $0x50] sm:$0xff] %v184
                %v186 = vld [vmem:[%s162 + $0xa8] sm:$0xff]
                %187 = vst [vmem:[%s163 + $0x58] sm:$0xff] %v186
              $region41: #{shading_forward_geom.1} parent=35 // loop_footer
                %s161 = sadd.s32 1, %s157
              $region42: #{shading_forward_geom.1} parent=35 // loop_footer_branch
                %156 = sbr.rel target = $region38
              $region43: #{shading_forward_geom.1} parent=35 // loop_exit
                _
            $region36: #{shading_forward_geom.1} parent=27 // pred_fallthru
              _
          $region28: #{shading_forward_geom.1} parent=23 // pred_fallthru
            _
          %224 = vnop
        $region24: #{shading_forward_geom.1} parent=19 // pred_fallthru
          _
        // Predicated region
        $region59: #{shading_forward_geom.1} parent=19 // pred_check
          %p225 = pneg %p77
        $region60: #{shading_forward_geom.1} parent=19 // pred_check_branch
          %227 = sbr.rel (%p225) target = $region62
        $region61: #{shading_forward_geom.1} parent=19 // pred_region
          %s228 = sand.u32 %s67, 1
          %s229 = sand.u32 %s67, 1
          %s230 = smul.addr %s229, 48
          %s231 = scalar_lea.vmem [#allocation5], %s230
          %s232 = smul.u32 2, %s10
          %s233 = smul.addr %s232, 8
          %s234 = scalar_lea.vmem %s2, %s233
          // Predicated region
          $region63: #{shading_forward_geom.1} parent=61 // pred_check
            _
          $region64: #{shading_forward_geom.1} parent=61 // pred_check_branch
            %236 = sbr.rel (0) target = $region66
          $region65: #{shading_forward_geom.1} parent=61 // pred_region
            // Predicated region
            $region67: #{shading_forward_geom.1} parent=65 // pred_check
              _
            $region68: #{shading_forward_geom.1} parent=65 // pred_check_branch
              %238 = sbr.rel (0) target = $region70
            $region69: #{shading_forward_geom.1} parent=65 // pred_region
              // Predicated region
              $region82: #{shading_forward_geom.1} parent=69 // pred_check
                _
              $region83: #{shading_forward_geom.1} parent=69 // pred_check_branch
                %263 = sbr.rel (0) target = $region85
              $region84: #{shading_forward_geom.1} parent=69 // pred_region
                loop: start=0, step=1, limit=1
                $region86: #{shading_forward_geom.1} parent=84 // loop_pre_header
                  _
                $region87: #{shading_forward_geom.1} parent=84 // loop_header
                  %s265 = sphi 0, %s269
                  %p266 = scmp.ge.s32.totalorder %s265, 1
                  %s270 = sphi %s234, %s234
                  %s271 = sphi %s231, %s231
                $region88: #{shading_forward_geom.1} parent=84 // loop_header_branch
                  %268 = sbr.rel (%p266) target = $region92
                $region89: #{shading_forward_geom.1} parent=84 // loop_body
                  %v272 = vld [vmem:[%s270] sm:$0xff]
                  %273 = vst [vmem:[%s271] sm:$0xff] %v272
                  %v274 = vld [vmem:[%s270 + $0x8] sm:$0xff]
                  %275 = vst [vmem:[%s271 + $0x8] sm:$0xff] %v274
                  %v276 = vld [vmem:[%s270 + $0x20] sm:$0xff]
                  %277 = vst [vmem:[%s271 + $0x10] sm:$0xff] %v276
                  %v278 = vld [vmem:[%s270 + $0x28] sm:$0xff]
                  %279 = vst [vmem:[%s271 + $0x18] sm:$0xff] %v278
                  %v280 = vld [vmem:[%s270 + $0x40] sm:$0xff]
                  %281 = vst [vmem:[%s271 + $0x20] sm:$0xff] %v280
                  %v282 = vld [vmem:[%s270 + $0x48] sm:$0xff]
                  %283 = vst [vmem:[%s271 + $0x28] sm:$0xff] %v282
                $region90: #{shading_forward_geom.1} parent=84 // loop_footer
                  %s269 = sadd.s32 1, %s265
                $region91: #{shading_forward_geom.1} parent=84 // loop_footer_branch
                  %264 = sbr.rel target = $region87
                $region92: #{shading_forward_geom.1} parent=84 // loop_exit
                  _
              $region85: #{shading_forward_geom.1} parent=69 // pred_fallthru
                _
              // Predicated region
              $region93: #{shading_forward_geom.1} parent=69 // pred_check
                _
              $region94: #{shading_forward_geom.1} parent=69 // pred_check_branch
                %285 = sbr.rel target = $region96
              $region95: #{shading_forward_geom.1} parent=69 // pred_region
                _
              $region96: #{shading_forward_geom.1} parent=69 // pred_fallthru
                _
            $region70: #{shading_forward_geom.1} parent=65 // pred_fallthru
              _
            // Predicated region
            $region71: #{shading_forward_geom.1} parent=65 // pred_check
              _
            $region72: #{shading_forward_geom.1} parent=65 // pred_check_branch
              %240 = sbr.rel target = $region74
            $region73: #{shading_forward_geom.1} parent=65 // pred_region
              loop: start=0, step=1, limit=1
              $region75: #{shading_forward_geom.1} parent=73 // loop_pre_header
                _
              $region76: #{shading_forward_geom.1} parent=73 // loop_header
                %s243 = sphi 0, %s247
                %p244 = scmp.ge.s32.totalorder %s243, 1
                %s248 = sphi %s234, %s234
                %s249 = sphi %s231, %s231
              $region77: #{shading_forward_geom.1} parent=73 // loop_header_branch
                %246 = sbr.rel (%p244) target = $region81
              $region78: #{shading_forward_geom.1} parent=73 // loop_body
                %v250 = vld [vmem:[%s248] sm:$0xff]
                %251 = vst [vmem:[%s249] sm:$0xff] %v250
                %v252 = vld [vmem:[%s248 + $0x8] sm:$0xff]
                %253 = vst [vmem:[%s249 + $0x8] sm:$0xff] %v252
                %v254 = vld [vmem:[%s248 + $0x20] sm:$0xff]
                %255 = vst [vmem:[%s249 + $0x10] sm:$0xff] %v254
                %v256 = vld [vmem:[%s248 + $0x28] sm:$0xff]
                %257 = vst [vmem:[%s249 + $0x18] sm:$0xff] %v256
                %v258 = vld [vmem:[%s248 + $0x40] sm:$0xff]
                %259 = vst [vmem:[%s249 + $0x20] sm:$0xff] %v258
                %v260 = vld [vmem:[%s248 + $0x48] sm:$0xff]
                %261 = vst [vmem:[%s249 + $0x28] sm:$0xff] %v260
              $region79: #{shading_forward_geom.1} parent=73 // loop_footer
                %s247 = sadd.s32 1, %s243
              $region80: #{shading_forward_geom.1} parent=73 // loop_footer_branch
                %242 = sbr.rel target = $region76
              $region81: #{shading_forward_geom.1} parent=73 // loop_exit
                _
            $region74: #{shading_forward_geom.1} parent=65 // pred_fallthru
              _
          $region66: #{shading_forward_geom.1} parent=61 // pred_fallthru
            _
          %286 = vnop
        $region62: #{shading_forward_geom.1} parent=19 // pred_fallthru
          _
      $region20: #{shading_forward_geom.1} parent=5 // pred_fallthru
        _
      %p287 = scmp.le.s32.totalorder 1, %s10
      %p288 = scmp.lt.s32.totalorder %s10, 3
      %p289 = pnand %p287, %p288
      %p290 = pneg %p289
      // Predicated region
      $region97: #{shading_forward_geom.1} parent=5 // pred_check
        _
      $region98: #{shading_forward_geom.1} parent=5 // pred_check_branch
        %292 = sbr.rel (%p289) target = $region100
      $region99: #{shading_forward_geom.1} parent=5 // pred_region
        %s293 = ssub.s32 %s10, 1
        // Predicated region
        $region101: #{shading_forward_geom.1} parent=99 // pred_check
          %p294 = pneg %p31
        $region102: #{shading_forward_geom.1} parent=99 // pred_check_branch
          %296 = sbr.rel (%p294) target = $region104
        $region103: #{shading_forward_geom.1} parent=99 // pred_region
          %297 = dma.done [#allocation3], 16
        $region104: #{shading_forward_geom.1} parent=99 // pred_fallthru
          _
        %s298 = sand.u32 %s44, 1
        %s299 = sand.u32 %s44, 1
        %s300 = smul.addr %s299, 96
        %s301 = scalar_lea.vmem [#allocation4], %s300
        // Predicated region
        $region105: #{shading_forward_geom.1} parent=99 // pred_check
          %p302 = pneg %p57
        $region106: #{shading_forward_geom.1} parent=99 // pred_check_branch
          %304 = sbr.rel (%p302) target = $region108
        $region107: #{shading_forward_geom.1} parent=99 // pred_region
          _
        $region108: #{shading_forward_geom.1} parent=99 // pred_fallthru
          _
        %s305 = sand.u32 %s70, 1
        %s306 = sand.u32 %s70, 1
        %s307 = smul.addr %s306, 48
        %s308 = scalar_lea.vmem [#allocation5], %s307
        // Predicated region
        $region109: #{shading_forward_geom.1} parent=99 // pred_check
          %p309 = pneg %p83
        $region110: #{shading_forward_geom.1} parent=99 // pred_check_branch
          %311 = sbr.rel (%p309) target = $region112
        $region111: #{shading_forward_geom.1} parent=99 // pred_region
          _
        $region112: #{shading_forward_geom.1} parent=99 // pred_fallthru
          _
        %312 = sfence
        %p313 = pneg %p31
        %p314 = pneg %p28
        %s315 = sand.u32 %s44, 1
        %s316 = sand.u32 %s44, 1
        %s317 = smul.addr %s316, 96
        %s318 = scalar_lea.vmem [#allocation4], %s317
        %p319 = pneg %p57
        %p320 = pneg %p54
        %s321 = sand.u32 %s70, 1
        %s322 = sand.u32 %s70, 1
        %s323 = smul.addr %s322, 48
        %s324 = scalar_lea.vmem [#allocation5], %s323
        %p325 = pneg %p83
        %p326 = pneg %p80
        %p327 = pneg %p109
        %p328 = pneg %p106
        %s329 = sand.u32 %s96, 1
        %s330 = sand.u32 %s96, 1
        %s331 = smul.addr %s330, 48
        %s332 = scalar_lea.vmem [#allocation6], %s331
        %s333 = smul.u32 2, %s15
        %s334 = smul.u32 2, %s15
        %s335 = smul.u32 2, %s15
        %s336 = sld [smem:[#allocation2]]
        %s337 = sld [smem:[#allocation2 + $0x1]]
        %s338 = sld [smem:[#allocation2 + $0x2]]
        %s339 = sld [smem:[#allocation2 + $0x3]]
        %s340 = sld [smem:[#allocation2 + $0x4]]
        %s341 = sld [smem:[#allocation2 + $0x5]]
        %s342 = sld [smem:[#allocation2 + $0x6]]
        %s343 = sld [smem:[#allocation2 + $0x7]]
        %s344 = sld [smem:[#allocation2 + $0x8]]
        %s345 = sld [smem:[#allocation2 + $0x9]]
        %s346 = sld [smem:[#allocation2 + $0xa]]
        %s347 = sld [smem:[#allocation2 + $0xb]]
        %v348 = vld [vmem:[%s301] sm:$0xff]
        %v349 = vld [vmem:[%s301 + $0x8] sm:$0xff]
        %v350 = vstv %s336
        %v351 = vmul.f32 %v348, %v350
        %v352 = vmul.f32 %v349, %v350
        %s353 = scalar_lea.vmem %s301, 16 [#allocation4]
        %v354 = vld [vmem:[%s353] sm:$0xff]
        %v355 = vld [vmem:[%s353 + $0x8] sm:$0xff]
        %v356 = vmul.f32 %v354, %v350
        %v357 = vmul.f32 %v355, %v350
        %s358 = scalar_lea.vmem %s301, 32 [#allocation4]
        %v359 = vld [vmem:[%s358] sm:$0xff]
        %v360 = vld [vmem:[%s358 + $0x8] sm:$0xff]
        %v361 = vmul.f32 %v359, %v350
        %v362 = vmul.f32 %v360, %v350
        %s363 = scalar_lea.vmem %s301, 48 [#allocation4]
        %v364 = vld [vmem:[%s363] sm:$0xff]
        %v365 = vld [vmem:[%s363 + $0x8] sm:$0xff]
        %s366 = scalar_lea.vmem %s301, 64 [#allocation4]
        %v367 = vld [vmem:[%s366] sm:$0xff]
        %v368 = vld [vmem:[%s366 + $0x8] sm:$0xff]
        %s369 = scalar_lea.vmem %s301, 80 [#allocation4]
        %v370 = vld [vmem:[%s369] sm:$0xff]
        %v371 = vld [vmem:[%s369 + $0x8] sm:$0xff]
        %v372 = vstv %s344
        %v373 = vsub.f32 %v372, %v351
        %v374 = vsub.f32 %v372, %v352
        %v375 = vstv %s345
        %v376 = vsub.f32 %v375, %v356
        %v377 = vsub.f32 %v375, %v357
        %v378 = vstv %s346
        %v379 = vsub.f32 %v378, %v361
        %v380 = vsub.f32 %v378, %v362
        %v381 = vmul.f32 %v373, %v373
        %v382 = vmul.f32 %v374, %v374
        %v383 = vmul.f32 %v376, %v376
        %v384 = vmul.f32 %v377, %v377
        %v385 = vadd.f32 %v381, %v383
        %v386 = vadd.f32 %v382, %v384
        %v387 = vmul.f32 %v379, %v379
        %v388 = vmul.f32 %v380, %v380
        %v389 = vadd.f32 %v385, %v387
        %v390 = vadd.f32 %v386, %v388
        %v391 = vadd.f32 %v389, 1e-12
        %v392 = vadd.f32 %v390, 1e-12
        %v393 = vrsqrt.pop %v391
        %v394 = vrsqrt.pop %v392
        %v395 = vmul.f32 %v364, %v364
        %v396 = vmul.f32 %v365, %v365
        %v397 = vmul.f32 %v367, %v367
        %v398 = vmul.f32 %v368, %v368
        %v399 = vadd.f32 %v395, %v397
        %v400 = vadd.f32 %v396, %v398
        %v401 = vmul.f32 %v370, %v370
        %v402 = vmul.f32 %v371, %v371
        %v403 = vadd.f32 %v399, %v401
        %v404 = vadd.f32 %v400, %v402
        %v405 = vadd.f32 %v403, 1e-12
        %v406 = vadd.f32 %v404, 1e-12
        %v407 = vrsqrt.pop %v405
        %v408 = vrsqrt.pop %v406
        %v409 = vmul.f32 %v364, %v373
        %v410 = vmul.f32 %v365, %v374
        %v411 = vmul.f32 %v367, %v376
        %v412 = vmul.f32 %v368, %v377
        %v413 = vadd.f32 %v409, %v411
        %v414 = vadd.f32 %v410, %v412
        %v415 = vmul.f32 %v370, %v379
        %v416 = vmul.f32 %v371, %v380
        %v417 = vadd.f32 %v413, %v415
        %v418 = vadd.f32 %v414, %v416
        %v419 = vmul.f32 %v393, %v407
        %v420 = vmul.f32 %v394, %v408
        %v421 = vmul.f32 %v417, %v419
        %v422 = vmul.f32 %v418, %v420
        %v423 = vmax.f32 %v421, 0.0
        %v424 = vmax.f32 %v422, 0.0
        %v425 = vmul.f32 %v423, 0.31830987
        %v426 = vmul.f32 %v424, 0.31830987
        %v427 = vstv %s340
        %v428 = vmul.f32 %v351, %v427
        %v429 = vmul.f32 %v352, %v427
        %v430 = vstv %s341
        %v431 = vmul.f32 %v356, %v430
        %v432 = vmul.f32 %v357, %v430
        %v433 = vadd.f32 %v428, %v431
        %v434 = vadd.f32 %v429, %v432
        %v435 = vstv %s342
        %v436 = vmul.f32 %v361, %v435
        %v437 = vmul.f32 %v362, %v435
        %v438 = vadd.f32 %v433, %v436
        %v439 = vadd.f32 %v434, %v437
        %v440 = vstv %s343
        %v441 = vadd.f32 %v438, %v440
        %v442 = vadd.f32 %v439, %v440
        %v443 = vstv %s347
        %v444 = vsub.f32 %v441, %v443
        %v445 = vsub.f32 %v442, %v443
        %v446 = vmul.f32 %v444, %v444
        %v447 = vmul.f32 %v445, %v445
        %v448 = vstv %s338
        %v449 = vmul.f32 %v448, %v446
        %v450 = vmul.f32 %v448, %v447
        %v451 = vmul.f32 %v449, 1.442695
        %v452 = vpow.pop %v451
        %v453 = vmul.f32 %v450, 1.442695
        %v454 = vpow.pop %v453
        %v455 = vstv %s339
        %v456 = vmul.f32 %v455, %v452
        %v457 = vmul.f32 %v455, %v454
        %v458 = vstv %s337
        %v459 = vadd.f32 %v456, %v458
        %v460 = vadd.f32 %v457, %v458
        %v461 = vmul.f32 %v459, %v425
        %v462 = vmul.f32 %v460, %v426
        %v463 = vld [vmem:[%s308] sm:$0xff]
        %v464 = vld [vmem:[%s308 + $0x8] sm:$0xff]
        %v465 = vld [vmem:[%s308 + $0x10] sm:$0xff]
        %v466 = vld [vmem:[%s308 + $0x18] sm:$0xff]
        %v467 = vld [vmem:[%s308 + $0x20] sm:$0xff]
        %v468 = vld [vmem:[%s308 + $0x28] sm:$0xff]
        %v469 = vmax.f32 %v463, 0.0
        %v470 = vmax.f32 %v464, 0.0
        %v471 = vmax.f32 %v465, 0.0
        %v472 = vmax.f32 %v466, 0.0
        %v473 = vmax.f32 %v467, 0.0
        %v474 = vmax.f32 %v468, 0.0
        %vm475 = vcmp.ne.f32.partialorder %v463, %v463
        %vm476 = vcmp.ne.f32.partialorder %v464, %v464
        %vm477 = vcmp.ne.f32.partialorder %v465, %v465
        %vm478 = vcmp.ne.f32.partialorder %v466, %v466
        %vm479 = vcmp.ne.f32.partialorder %v467, %v467
        %vm480 = vcmp.ne.f32.partialorder %v468, %v468
        %v481 = vadd.f32 %v463, 0.0
        %v482 = vadd.f32 %v464, 0.0
        %v483 = vadd.f32 %v465, 0.0
        %v484 = vadd.f32 %v466, 0.0
        %v485 = vadd.f32 %v467, 0.0
        %v486 = vadd.f32 %v468, 0.0
        %v487 = vand.u32 2147483647, %v463
        %v488 = vand.u32 2147483647, %v464
        %v489 = vand.u32 2147483647, %v465
        %v490 = vand.u32 2147483647, %v466
        %v491 = vand.u32 2147483647, %v467
        %v492 = vand.u32 2147483647, %v468
        %v493 = vsub.f32 0.0, %v487
        %v494 = vsub.f32 0.0, %v488
        %v495 = vsub.f32 0.0, %v489
        %v496 = vsub.f32 0.0, %v490
        %v497 = vsub.f32 0.0, %v491
        %v498 = vsub.f32 0.0, %v492
        %v499 = vmul.f32 %v493, 1.442695
        %v500 = vpow.pop %v499
        %v501 = vmul.f32 %v494, 1.442695
        %v502 = vpow.pop %v501
        %v503 = vmul.f32 %v495, 1.442695
        %v504 = vpow.pop %v503
        %v505 = vmul.f32 %v496, 1.442695
        %v506 = vpow.pop %v505
        %v507 = vmul.f32 %v497, 1.442695
        %v508 = vpow.pop %v507
        %v509 = vmul.f32 %v498, 1.442695
        %v510 = vpow.pop %v509
        %v511 = vadd.f32 %v500, 1.0
        %v512 = vlog2.pop %v511
        %v513 = vmul.f32 %v512, 0.6931472
        %v514 = vmul.f32 -0.5, %v500
        %v515 = vadd.f32 %v514, 1.0
        %v516 = vmul.f32 %v515, %v500
        %v517 = vand.u32 2147483647, %v500
        %vm518 = vcmp.lt.f32.partialorder %v517, 0.0004427343
        %v519 = vsel %vm518, %v516, %v513
        %v520 = vadd.f32 %v502, 1.0
        %v521 = vlog2.pop %v520
        %v522 = vmul.f32 %v521, 0.6931472
        %v523 = vmul.f32 -0.5, %v502
        %v524 = vadd.f32 %v523, 1.0
        %v525 = vmul.f32 %v524, %v502
        %v526 = vand.u32 2147483647, %v502
        %vm527 = vcmp.lt.f32.partialorder %v526, 0.0004427343
        %v528 = vsel %vm527, %v525, %v522
        %v529 = vadd.f32 %v504, 1.0
        %v530 = vlog2.pop %v529
        %v531 = vmul.f32 %v530, 0.6931472
        %v532 = vmul.f32 -0.5, %v504
        %v533 = vadd.f32 %v532, 1.0
        %v534 = vmul.f32 %v533, %v504
        %v535 = vand.u32 2147483647, %v504
        %vm536 = vcmp.lt.f32.partialorder %v535, 0.0004427343
        %v537 = vsel %vm536, %v534, %v531
        %v538 = vadd.f32 %v506, 1.0
        %v539 = vlog2.pop %v538
        %v540 = vmul.f32 %v539, 0.6931472
        %v541 = vmul.f32 -0.5, %v506
        %v542 = vadd.f32 %v541, 1.0
        %v543 = vmul.f32 %v542, %v506
        %v544 = vand.u32 2147483647, %v506
        %vm545 = vcmp.lt.f32.partialorder %v544, 0.0004427343
        %v546 = vsel %vm545, %v543, %v540
        %v547 = vadd.f32 %v508, 1.0
        %v548 = vlog2.pop %v547
        %v549 = vmul.f32 %v548, 0.6931472
        %v550 = vmul.f32 -0.5, %v508
        %v551 = vadd.f32 %v550, 1.0
        %v552 = vmul.f32 %v551, %v508
        %v553 = vand.u32 2147483647, %v508
        %vm554 = vcmp.lt.f32.partialorder %v553, 0.0004427343
        %v555 = vsel %vm554, %v552, %v549
        %v556 = vadd.f32 %v510, 1.0
        %v557 = vlog2.pop %v556
        %v558 = vmul.f32 %v557, 0.6931472
        %v559 = vmul.f32 -0.5, %v510
        %v560 = vadd.f32 %v559, 1.0
        %v561 = vmul.f32 %v560, %v510
        %v562 = vand.u32 2147483647, %v510
        %vm563 = vcmp.lt.f32.partialorder %v562, 0.0004427343
        %v564 = vsel %vm563, %v561, %v558
        %v565 = vadd.f32 %v469, %v519
        %v566 = vadd.f32 %v470, %v528
        %v567 = vadd.f32 %v471, %v537
        %v568 = vadd.f32 %v472, %v546
        %v569 = vadd.f32 %v473, %v555
        %v570 = vadd.f32 %v474, %v564
        %v571 = vsel %vm475, %v481, %v565
        %v572 = vsel %vm476, %v482, %v566
        %v573 = vsel %vm477, %v483, %v567
        %v574 = vsel %vm478, %v484, %v568
        %v575 = vsel %vm479, %v485, %v569
        %v576 = vsel %vm480, %v486, %v570
        %v577 = vmul.f32 %v571, %v461
        %v578 = vmul.f32 %v572, %v462
        %v579 = vmul.f32 %v573, %v461
        %v580 = vmul.f32 %v574, %v462
        %v581 = vmul.f32 %v575, %v461
        %v582 = vmul.f32 %v576, %v462
        %583 = vst [vmem:[%s332] sm:$0xff] %v577
        %584 = vst [vmem:[%s332 + $0x8] sm:$0xff] %v578
        %585 = vst [vmem:[%s332 + $0x10] sm:$0xff] %v579
        %586 = vst [vmem:[%s332 + $0x18] sm:$0xff] %v580
        %587 = vst [vmem:[%s332 + $0x20] sm:$0xff] %v581
        %588 = vst [vmem:[%s332 + $0x28] sm:$0xff] %v582
        %s589 = sand.u32 %s96, 1
        %s590 = sand.u32 %s96, 1
        %s591 = smul.addr %s590, 48
        %s592 = scalar_lea.vmem [#allocation6], %s591
        // Predicated region
        $region113: #{shading_forward_geom.1} parent=99 // pred_check
          %p593 = pneg %p106
        $region114: #{shading_forward_geom.1} parent=99 // pred_check_branch
          %595 = sbr.rel (%p593) target = $region116
        $region115: #{shading_forward_geom.1} parent=99 // pred_region
          %s596 = smul.u32 2, %s15
          %s597 = smul.addr %s596, 8
          %s598 = scalar_lea.vmem %s3, %s597
          // Predicated region
          $region117: #{shading_forward_geom.1} parent=115 // pred_check
            _
          $region118: #{shading_forward_geom.1} parent=115 // pred_check_branch
            %600 = sbr.rel (0) target = $region120
          $region119: #{shading_forward_geom.1} parent=115 // pred_region
            // Predicated region
            $region121: #{shading_forward_geom.1} parent=119 // pred_check
              _
            $region122: #{shading_forward_geom.1} parent=119 // pred_check_branch
              %602 = sbr.rel (0) target = $region124
            $region123: #{shading_forward_geom.1} parent=119 // pred_region
              // Predicated region
              $region136: #{shading_forward_geom.1} parent=123 // pred_check
                _
              $region137: #{shading_forward_geom.1} parent=123 // pred_check_branch
                %627 = sbr.rel (0) target = $region139
              $region138: #{shading_forward_geom.1} parent=123 // pred_region
                loop: start=0, step=1, limit=1
                $region140: #{shading_forward_geom.1} parent=138 // loop_pre_header
                  _
                $region141: #{shading_forward_geom.1} parent=138 // loop_header
                  %s629 = sphi 0, %s633
                  %p630 = scmp.ge.s32.totalorder %s629, 1
                  %s634 = sphi %s592, %s592
                  %s635 = sphi %s598, %s598
                $region142: #{shading_forward_geom.1} parent=138 // loop_header_branch
                  %632 = sbr.rel (%p630) target = $region146
                $region143: #{shading_forward_geom.1} parent=138 // loop_body
                  %v636 = vld [vmem:[%s634] sm:$0xff]
                  %637 = vst [vmem:[%s635] sm:$0xff] %v636
                  %v638 = vld [vmem:[%s634 + $0x8] sm:$0xff]
                  %639 = vst [vmem:[%s635 + $0x8] sm:$0xff] %v638
                  %v640 = vld [vmem:[%s634 + $0x10] sm:$0xff]
                  %641 = vst [vmem:[%s635 + $0x20] sm:$0xff] %v640
                  %v642 = vld [vmem:[%s634 + $0x18] sm:$0xff]
                  %643 = vst [vmem:[%s635 + $0x28] sm:$0xff] %v642
                  %v644 = vld [vmem:[%s634 + $0x20] sm:$0xff]
                  %645 = vst [vmem:[%s635 + $0x40] sm:$0xff] %v644
                  %v646 = vld [vmem:[%s634 + $0x28] sm:$0xff]
                  %647 = vst [vmem:[%s635 + $0x48] sm:$0xff] %v646
                $region144: #{shading_forward_geom.1} parent=138 // loop_footer
                  %s633 = sadd.s32 1, %s629
                $region145: #{shading_forward_geom.1} parent=138 // loop_footer_branch
                  %628 = sbr.rel target = $region141
                $region146: #{shading_forward_geom.1} parent=138 // loop_exit
                  _
              $region139: #{shading_forward_geom.1} parent=123 // pred_fallthru
                _
              // Predicated region
              $region147: #{shading_forward_geom.1} parent=123 // pred_check
                _
              $region148: #{shading_forward_geom.1} parent=123 // pred_check_branch
                %649 = sbr.rel target = $region150
              $region149: #{shading_forward_geom.1} parent=123 // pred_region
                _
              $region150: #{shading_forward_geom.1} parent=123 // pred_fallthru
                _
            $region124: #{shading_forward_geom.1} parent=119 // pred_fallthru
              _
            // Predicated region
            $region125: #{shading_forward_geom.1} parent=119 // pred_check
              _
            $region126: #{shading_forward_geom.1} parent=119 // pred_check_branch
              %604 = sbr.rel target = $region128
            $region127: #{shading_forward_geom.1} parent=119 // pred_region
              loop: start=0, step=1, limit=1
              $region129: #{shading_forward_geom.1} parent=127 // loop_pre_header
                _
              $region130: #{shading_forward_geom.1} parent=127 // loop_header
                %s607 = sphi 0, %s611
                %p608 = scmp.ge.s32.totalorder %s607, 1
                %s612 = sphi %s592, %s592
                %s613 = sphi %s598, %s598
              $region131: #{shading_forward_geom.1} parent=127 // loop_header_branch
                %610 = sbr.rel (%p608) target = $region135
              $region132: #{shading_forward_geom.1} parent=127 // loop_body
                %v614 = vld [vmem:[%s612] sm:$0xff]
                %615 = vst [vmem:[%s613] sm:$0xff] %v614
                %v616 = vld [vmem:[%s612 + $0x8] sm:$0xff]
                %617 = vst [vmem:[%s613 + $0x8] sm:$0xff] %v616
                %v618 = vld [vmem:[%s612 + $0x10] sm:$0xff]
                %619 = vst [vmem:[%s613 + $0x20] sm:$0xff] %v618
                %v620 = vld [vmem:[%s612 + $0x18] sm:$0xff]
                %621 = vst [vmem:[%s613 + $0x28] sm:$0xff] %v620
                %v622 = vld [vmem:[%s612 + $0x20] sm:$0xff]
                %623 = vst [vmem:[%s613 + $0x40] sm:$0xff] %v622
                %v624 = vld [vmem:[%s612 + $0x28] sm:$0xff]
                %625 = vst [vmem:[%s613 + $0x48] sm:$0xff] %v624
              $region133: #{shading_forward_geom.1} parent=127 // loop_footer
                %s611 = sadd.s32 1, %s607
              $region134: #{shading_forward_geom.1} parent=127 // loop_footer_branch
                %606 = sbr.rel target = $region130
              $region135: #{shading_forward_geom.1} parent=127 // loop_exit
                _
            $region128: #{shading_forward_geom.1} parent=119 // pred_fallthru
              _
          $region120: #{shading_forward_geom.1} parent=115 // pred_fallthru
            _
          %650 = vnop
        $region116: #{shading_forward_geom.1} parent=99 // pred_fallthru
          _
      $region100: #{shading_forward_geom.1} parent=5 // pred_fallthru
        _
      %p651 = scmp.le.s32.totalorder 2, %s10
      // Predicated region
      $region151: #{shading_forward_geom.1} parent=5 // pred_check
        %p652 = pneg %p651
      $region152: #{shading_forward_geom.1} parent=5 // pred_check_branch
        %654 = sbr.rel (%p652) target = $region154
      $region153: #{shading_forward_geom.1} parent=5 // pred_region
        %s655 = ssub.s32 %s10, 2
        // Predicated region
        $region155: #{shading_forward_geom.1} parent=153 // pred_check
          %p656 = pneg %p112
        $region156: #{shading_forward_geom.1} parent=153 // pred_check_branch
          %658 = sbr.rel (%p656) target = $region158
        $region157: #{shading_forward_geom.1} parent=153 // pred_region
          %s659 = sand.u32 %s97, 1
          %s660 = sand.u32 %s97, 1
          %s661 = smul.addr %s660, 48
          %s662 = scalar_lea.vmem [#allocation6], %s661
        $region158: #{shading_forward_geom.1} parent=153 // pred_fallthru
          _
      $region154: #{shading_forward_geom.1} parent=5 // pred_fallthru
        _
    $region6: #{shading_forward_geom.1} parent=1 // loop_footer
      %s14 = sadd.s32 1, %s10
    $region7: #{shading_forward_geom.1} parent=1 // loop_footer_branch
      %9 = sbr.rel target = $region3
    $region8: #{shading_forward_geom.1} parent=1 // loop_exit
      _
    %663 = vsyncpa [#allocation3], 1
    %s664 = scalar_lea.sflag [#allocation3], 1
    %665 = vsyncpa %s664, 1

</llo_original>
